<compile_context>
chip_gen: v7x
topology: tpu7x:2x2x1
jax: 0.10.0
libtpu: 0.0.40
codegen_flags: <defaults>
</compile_context>

<pallas_src>
import functools

import jax
import jax.numpy as jnp
from jax.experimental import pallas as pl
from jax.experimental.pallas import tpu as pltpu


def _basic_block_kernel(x_ref, w1_ref, s1_ref, b1_ref, w2_ref, s2_ref, b2_ref,
                        out_ref, *, H, W):
    """One batch element, fully fused BasicBlock.

    x_ref  : (1, Cpad, H*W)    input tile (channels padded to 8), lanes = H*W
    w1_ref : (Cpad, 9*Cpad)    conv1 weights, im2col layout (tap-major)
    s1_ref : (Cpad, 1)         folded BN1 scale (padded rows = 0)
    b1_ref : (Cpad, 1)         folded BN1 bias  (padded rows = 0)
    w2_ref : (Cout, 9*Cpad)    conv2 weights, im2col layout
    s2_ref : (Cout, 1)         folded BN2 scale
    b2_ref : (Cout, 1)         folded BN2 bias
    out_ref: (1, Cout, H*W)
    """
    HW = H * W
    x = x_ref[0]                                     # (Cpad, HW)
    Cpad = x.shape[0]
    Cout = out_ref.shape[1]

    zeros = jnp.zeros((Cpad, HW), x.dtype)
    col = jax.lax.broadcasted_iota(jnp.int32, (Cpad, HW), 1) % W
    mask_l = col >= 1            # source column col-1 is in-bounds (ox = -1)
    mask_r = col < (W - 1)       # source column col+1 is in-bounds (ox = +1)

    def shift_lanes(inp, s):
        """shifted[:, p] = inp[:, p+s] with zero fill outside [0, HW)."""
        if s == 0:
            return inp
        if s > 0:
            return jnp.concatenate([inp[:, s:], zeros[:, :s]], axis=1)
        return jnp.concatenate([zeros[:, :(-s)], inp[:, :HW + s]], axis=1)

    def conv3x3(inp, w_mat):
        """Same-padded 3x3 conv: (Cpad, HW) x (Co, 9*Cpad) -> (Co, HW) f32."""
        taps = []
        for dy in range(3):
            for dx in range(3):
                oy, ox = dy - 1, dx - 1
                t = shift_lanes(inp, oy * W + ox)
                if ox == -1:
                    t = jnp.where(mask_l, t, zeros)
                elif ox == 1:
                    t = jnp.where(mask_r, t, zeros)
                taps.append(t)
        slab = jnp.concatenate(taps, axis=0)          # (9*Cpad, HW) im2col
        return jnp.dot(w_mat, slab, preferred_element_type=jnp.float32)

    # conv1 + bn1 + relu  (intermediate never leaves the chip)
    h = conv3x3(x, w1_ref[...])                       # (Cpad, HW) f32
    h = jnp.maximum(h * s1_ref[...] + b1_ref[...], 0.0)

    # conv2 + bn2 + residual add + relu (residual = already-resident x tile)
    o = conv3x3(h.astype(x.dtype), w2_ref[...])       # (Cout, HW) f32
    o = o * s2_ref[...] + b2_ref[...]
    o = jnp.maximum(o + x[:Cout].astype(jnp.float32), 0.0)

    out_ref[0] = o.astype(out_ref.dtype)


def _fold_bn(gamma, beta, mean, var, eps=1e-5):
    scale = gamma / jnp.sqrt(var + eps)
    bias = beta - mean * scale
    return scale, bias


def _pack_weight(w_hwio, cin_pad, cout_pad):
    """(3,3,Cin,Cout) HWIO -> (cout_pad, 9*cin_pad) im2col matrix."""
    kh, kw, cin, cout = w_hwio.shape
    wp = jnp.zeros((kh, kw, cin_pad, cout_pad), w_hwio.dtype)
    wp = wp.at[:, :, :cin, :cout].set(w_hwio)
    return wp.reshape(kh * kw * cin_pad, cout_pad).T


def _pad_vec(v, rows):
    out = jnp.zeros((rows, 1), v.dtype)
    return out.at[:v.shape[0], 0].set(v)


def basic_block_forward(x_nchw, p):
    """relu(bn2(conv2(relu(bn1(conv1(x))))) + x); stride=1, no downsample."""
    N, Cin, H, W = x_nchw.shape
    Cout = p["w1"].shape[-1]
    HW = H * W
    Cpad = max(8, ((Cin + 7) // 8) * 8)          # channel pad to sublane mult

    x = x_nchw.reshape(N, Cin, HW)               # NCHW, spatial on lanes
    if Cpad != Cin:
        x = jnp.pad(x, ((0, 0), (0, Cpad - Cin), (0, 0)))

    s1, b1 = _fold_bn(p["gamma1"], p["beta1"], p["mean1"], p["var1"])
    s2, b2 = _fold_bn(p["gamma2"], p["beta2"], p["mean2"], p["var2"])

    w1m = _pack_weight(p["w1"], Cpad, Cpad)      # (Cpad, 9*Cpad)
    w2m = _pack_weight(p["w2"], Cpad, Cout)      # (Cout, 9*Cpad)
    s1p, b1p = _pad_vec(s1, Cpad), _pad_vec(b1, Cpad)
    s2v, b2v = s2.reshape(Cout, 1), b2.reshape(Cout, 1)

    kernel = functools.partial(_basic_block_kernel, H=H, W=W)
    out = pl.pallas_call(
        kernel,
        out_shape=jax.ShapeDtypeStruct((N, Cout, HW), x_nchw.dtype),
        grid_spec=pltpu.PrefetchScalarGridSpec(
            num_scalar_prefetch=0,
            grid=(N,),
            in_specs=[
                pl.BlockSpec((1, Cpad, HW), lambda n: (n, 0, 0)),
                pl.BlockSpec((Cpad, 9 * Cpad), lambda n: (0, 0)),
                pl.BlockSpec((Cpad, 1), lambda n: (0, 0)),
                pl.BlockSpec((Cpad, 1), lambda n: (0, 0)),
                pl.BlockSpec((Cout, 9 * Cpad), lambda n: (0, 0)),
                pl.BlockSpec((Cout, 1), lambda n: (0, 0)),
                pl.BlockSpec((Cout, 1), lambda n: (0, 0)),
            ],
            out_specs=pl.BlockSpec((1, Cout, HW), lambda n: (n, 0, 0)),
        ),
        compiler_params=pltpu.CompilerParams(
            dimension_semantics=("parallel",)),
    )(x, w1m, s1p, b1p, w2m, s2v, b2v)
    return out.reshape(N, Cout, H, W)


# ----------------------------- reference (pure JAX) -----------------------------
def _conv_ref(x_nhwc, w_hwio):
    return jax.lax.conv_general_dilated(
        x_nhwc, w_hwio, window_strides=(1, 1), padding="SAME",
        dimension_numbers=("NHWC", "HWIO", "NHWC"))


def basic_block_reference(x_nchw, p):
    x = jnp.transpose(x_nchw, (0, 2, 3, 1))
    s1, b1 = _fold_bn(p["gamma1"], p["beta1"], p["mean1"], p["var1"])
    s2, b2 = _fold_bn(p["gamma2"], p["beta2"], p["mean2"], p["var2"])
    out = jnp.maximum(_conv_ref(x, p["w1"]) * s1 + b1, 0.0)
    out = _conv_ref(out, p["w2"]) * s2 + b2
    out = jnp.maximum(out + x, 0.0)
    return jnp.transpose(out, (0, 3, 1, 2))


if __name__ == "__main__":
    N, C, H, W = 2, 4, 16, 16      # inplanes = planes = 4, stride = 1
    planes = C

    key = jax.random.PRNGKey(0)
    kx, kw1, kw2, kg1, kb1, km1, kv1, kg2, kb2, km2, kv2 = jax.random.split(key, 11)

    x = jax.random.normal(kx, (N, C, H, W), jnp.float32)

    fan_in = 3 * 3 * C
    params = {
        "w1": jax.random.normal(kw1, (3, 3, C, planes), jnp.float32)
              * (2.0 / fan_in) ** 0.5,
        "w2": jax.random.normal(kw2, (3, 3, planes, planes), jnp.float32)
              * (2.0 / (3 * 3 * planes)) ** 0.5,
        "gamma1": 1.0 + 0.1 * jax.random.normal(kg1, (planes,), jnp.float32),
        "beta1": 0.1 * jax.random.normal(kb1, (planes,), jnp.float32),
        "mean1": 0.1 * jax.random.normal(km1, (planes,), jnp.float32),
        "var1": jnp.abs(jax.random.normal(kv1, (planes,), jnp.float32)) + 0.5,
        "gamma2": 1.0 + 0.1 * jax.random.normal(kg2, (planes,), jnp.float32),
        "beta2": 0.1 * jax.random.normal(kb2, (planes,), jnp.float32),
        "mean2": 0.1 * jax.random.normal(km2, (planes,), jnp.float32),
        "var2": jnp.abs(jax.random.normal(kv2, (planes,), jnp.float32)) + 0.5,
    }

    out = basic_block_forward(x, params)
    jax.block_until_ready(out)

    ref = basic_block_reference(x, params)
    err = float(jnp.max(jnp.abs(out - ref)))
    if not (out.shape == (N, C, H, W) and err < 1e-4):
        raise AssertionError(f"mismatch vs reference: max abs err = {err}")

    print("KERNEL_OK")
</pallas_src>

<mosaic_0001>
module attributes {stable_mosaic.version = 11 : i64} {
  func.func @_basic_block_kernel(%arg0: i32, %arg1: memref<1x8x256xf32, #tpu.memory_space<vmem>>, %arg2: memref<8x72xf32, #tpu.memory_space<vmem>>, %arg3: memref<8x1xf32, #tpu.memory_space<vmem>>, %arg4: memref<8x1xf32, #tpu.memory_space<vmem>>, %arg5: memref<4x72xf32, #tpu.memory_space<vmem>>, %arg6: memref<4x1xf32, #tpu.memory_space<vmem>>, %arg7: memref<4x1xf32, #tpu.memory_space<vmem>>, %arg8: memref<1x4x256xf32, #tpu.memory_space<vmem>>) attributes {dimension_semantics = [#tpu.dimension_semantics<parallel>], iteration_bounds = array<i64: 2>, scalar_prefetch = 0 : i64, scratch_operands = 0 : i64, tpu.core_type = #tpu.core_type<tc>, window_params = [{transform_indices = @transform_0, window_bounds = array<i64: 1, 8, 256>}, {pipeline_mode = #tpu.pipeline_mode<synchronous>, transform_indices = @transform_1, window_bounds = array<i64: 8, 72>}, {pipeline_mode = #tpu.pipeline_mode<synchronous>, transform_indices = @transform_2, window_bounds = array<i64: 8, 1>}, {pipeline_mode = #tpu.pipeline_mode<synchronous>, transform_indices = @transform_3, window_bounds = array<i64: 8, 1>}, {pipeline_mode = #tpu.pipeline_mode<synchronous>, transform_indices = @transform_4, window_bounds = array<i64: 4, 72>}, {pipeline_mode = #tpu.pipeline_mode<synchronous>, transform_indices = @transform_5, window_bounds = array<i64: 4, 1>}, {pipeline_mode = #tpu.pipeline_mode<synchronous>, transform_indices = @transform_6, window_bounds = array<i64: 4, 1>}, {transform_indices = @transform_7, window_bounds = array<i64: 1, 4, 256>}]} {
    %c0 = arith.constant 0 : index
    %c0_0 = arith.constant 0 : index
    %c0_1 = arith.constant 0 : index
    %0 = vector.load %arg1[%c0, %c0_0, %c0_1] : memref<1x8x256xf32, #tpu.memory_space<vmem>>, vector<1x8x256xf32>
    %1 = vector.shape_cast %0 : vector<1x8x256xf32> to vector<8x256xf32>
    %cst = arith.constant 0.000000e+00 : f32
    %2 = vector.broadcast %cst : f32 to vector<8x256xf32>
    %3 = tpu.iota {dimensions = array<i32: 1>} : vector<8x256xi32>
    %c16_i32 = arith.constant 16 : i32
    %c0_i32 = arith.constant 0 : i32
    %4 = arith.cmpi eq, %c16_i32, %c0_i32 : i32
    %c1_i32 = arith.constant 1 : i32
    %5 = arith.select %4, %c1_i32, %c16_i32 : i32
    %6 = vector.broadcast %5 : i32 to vector<8x256xi32>
    %7 = arith.remsi %3, %6 : vector<8x256xi32>
    %c0_i32_2 = arith.constant 0 : i32
    %8 = vector.broadcast %c0_i32_2 : i32 to vector<8x256xi32>
    %9 = arith.cmpi ne, %7, %8 : vector<8x256xi32>
    %c0_i32_3 = arith.constant 0 : i32
    %10 = vector.broadcast %c0_i32_3 : i32 to vector<8x256xi32>
    %11 = arith.cmpi slt, %7, %10 : vector<8x256xi32>
    %c0_i32_4 = arith.constant 0 : i32
    %12 = arith.cmpi slt, %5, %c0_i32_4 : i32
    %13 = vector.broadcast %12 : i1 to vector<8x256xi1>
    %14 = vector.broadcast %13 : vector<8x256xi1> to vector<8x256xi1>
    %15 = arith.xori %11, %14 : vector<8x256xi1>
    %16 = arith.andi %15, %9 : vector<8x256xi1>
    %17 = vector.broadcast %5 : i32 to vector<8x256xi32>
    %18 = arith.addi %7, %17 : vector<8x256xi32>
    %19 = arith.select %16, %18, %7 : vector<8x256xi1>, vector<8x256xi32>
    %c1_i32_5 = arith.constant 1 : i32
    %20 = vector.broadcast %c1_i32_5 : i32 to vector<8x256xi32>
    %21 = arith.cmpi sge, %19, %20 : vector<8x256xi32>
    %c15_i32 = arith.constant 15 : i32
    %22 = vector.broadcast %c15_i32 : i32 to vector<8x256xi32>
    %23 = arith.cmpi slt, %19, %22 : vector<8x256xi32>
    %c0_6 = arith.constant 0 : index
    %c0_7 = arith.constant 0 : index
    %24 = vector.load %arg2[%c0_6, %c0_7] : memref<8x72xf32, #tpu.memory_space<vmem>>, vector<8x72xf32>
    %25 = vector.extract_strided_slice %2 {offsets = [0, 0], sizes = [8, 17], strides = [1, 1]} : vector<8x256xf32> to vector<8x17xf32>
    %26 = vector.extract_strided_slice %1 {offsets = [0, 0], sizes = [8, 239], strides = [1, 1]} : vector<8x256xf32> to vector<8x239xf32>
    %27 = tpu.concatenate %25, %26 in 1 : vector<8x17xf32>, vector<8x239xf32> -> vector<8x256xf32>
    %28 = arith.select %21, %27, %2 : vector<8x256xi1>, vector<8x256xf32>
    %29 = vector.extract_strided_slice %2 {offsets = [0, 0], sizes = [8, 16], strides = [1, 1]} : vector<8x256xf32> to vector<8x16xf32>
    %30 = vector.extract_strided_slice %1 {offsets = [0, 0], sizes = [8, 240], strides = [1, 1]} : vector<8x256xf32> to vector<8x240xf32>
    %31 = tpu.concatenate %29, %30 in 1 : vector<8x16xf32>, vector<8x240xf32> -> vector<8x256xf32>
    %32 = vector.extract_strided_slice %2 {offsets = [0, 0], sizes = [8, 15], strides = [1, 1]} : vector<8x256xf32> to vector<8x15xf32>
    %33 = vector.extract_strided_slice %1 {offsets = [0, 0], sizes = [8, 241], strides = [1, 1]} : vector<8x256xf32> to vector<8x241xf32>
    %34 = tpu.concatenate %32, %33 in 1 : vector<8x15xf32>, vector<8x241xf32> -> vector<8x256xf32>
    %35 = arith.select %23, %34, %2 : vector<8x256xi1>, vector<8x256xf32>
    %36 = vector.extract_strided_slice %2 {offsets = [0, 0], sizes = [8, 1], strides = [1, 1]} : vector<8x256xf32> to vector<8x1xf32>
    %37 = vector.extract_strided_slice %1 {offsets = [0, 0], sizes = [8, 255], strides = [1, 1]} : vector<8x256xf32> to vector<8x255xf32>
    %38 = tpu.concatenate %36, %37 in 1 : vector<8x1xf32>, vector<8x255xf32> -> vector<8x256xf32>
    %39 = arith.select %21, %38, %2 : vector<8x256xi1>, vector<8x256xf32>
    %40 = vector.extract_strided_slice %1 {offsets = [0, 1], sizes = [8, 255], strides = [1, 1]} : vector<8x256xf32> to vector<8x255xf32>
    %41 = vector.extract_strided_slice %2 {offsets = [0, 0], sizes = [8, 1], strides = [1, 1]} : vector<8x256xf32> to vector<8x1xf32>
    %42 = tpu.concatenate %40, %41 in 1 : vector<8x255xf32>, vector<8x1xf32> -> vector<8x256xf32>
    %43 = arith.select %23, %42, %2 : vector<8x256xi1>, vector<8x256xf32>
    %44 = vector.extract_strided_slice %1 {offsets = [0, 15], sizes = [8, 241], strides = [1, 1]} : vector<8x256xf32> to vector<8x241xf32>
    %45 = vector.extract_strided_slice %2 {offsets = [0, 0], sizes = [8, 15], strides = [1, 1]} : vector<8x256xf32> to vector<8x15xf32>
    %46 = tpu.concatenate %44, %45 in 1 : vector<8x241xf32>, vector<8x15xf32> -> vector<8x256xf32>
    %47 = arith.select %21, %46, %2 : vector<8x256xi1>, vector<8x256xf32>
    %48 = vector.extract_strided_slice %1 {offsets = [0, 16], sizes = [8, 240], strides = [1, 1]} : vector<8x256xf32> to vector<8x240xf32>
    %49 = vector.extract_strided_slice %2 {offsets = [0, 0], sizes = [8, 16], strides = [1, 1]} : vector<8x256xf32> to vector<8x16xf32>
    %50 = tpu.concatenate %48, %49 in 1 : vector<8x240xf32>, vector<8x16xf32> -> vector<8x256xf32>
    %51 = vector.extract_strided_slice %1 {offsets = [0, 17], sizes = [8, 239], strides = [1, 1]} : vector<8x256xf32> to vector<8x239xf32>
    %52 = vector.extract_strided_slice %2 {offsets = [0, 0], sizes = [8, 17], strides = [1, 1]} : vector<8x256xf32> to vector<8x17xf32>
    %53 = tpu.concatenate %51, %52 in 1 : vector<8x239xf32>, vector<8x17xf32> -> vector<8x256xf32>
    %54 = arith.select %23, %53, %2 : vector<8x256xi1>, vector<8x256xf32>
    %55 = tpu.concatenate %28, %31, %35, %39, %1, %43, %47, %50, %54 in 0 : vector<8x256xf32>, vector<8x256xf32>, vector<8x256xf32>, vector<8x256xf32>, vector<8x256xf32>, vector<8x256xf32>, vector<8x256xf32>, vector<8x256xf32>, vector<8x256xf32> -> vector<72x256xf32>
    %cst_8 = arith.constant dense<0.000000e+00> : vector<8x256xf32>
    %56 = tpu.matmul %24, %55, %cst_8 {dimension_numbers = #tpu.dot_dimension_numbers<[1], [0], [0], [1], [0, 0, 1, 1], [], []>} : vector<8x72xf32>, vector<72x256xf32>, vector<8x256xf32> -> vector<8x256xf32>
    %c0_9 = arith.constant 0 : index
    %c0_10 = arith.constant 0 : index
    %57 = vector.load %arg3[%c0_9, %c0_10] : memref<8x1xf32, #tpu.memory_space<vmem>>, vector<8x1xf32>
    %58 = vector.broadcast %57 : vector<8x1xf32> to vector<8x256xf32>
    %59 = arith.mulf %56, %58 : vector<8x256xf32>
    %c0_11 = arith.constant 0 : index
    %c0_12 = arith.constant 0 : index
    %60 = vector.load %arg4[%c0_11, %c0_12] : memref<8x1xf32, #tpu.memory_space<vmem>>, vector<8x1xf32>
    %61 = vector.broadcast %60 : vector<8x1xf32> to vector<8x256xf32>
    %62 = arith.addf %59, %61 : vector<8x256xf32>
    %cst_13 = arith.constant 0.000000e+00 : f32
    %63 = vector.broadcast %cst_13 : f32 to vector<8x256xf32>
    %64 = arith.maximumf %62, %63 : vector<8x256xf32>
    %c0_14 = arith.constant 0 : index
    %c0_15 = arith.constant 0 : index
    %65 = vector.load %arg5[%c0_14, %c0_15] : memref<4x72xf32, #tpu.memory_space<vmem>>, vector<4x72xf32>
    %66 = vector.extract_strided_slice %2 {offsets = [0, 0], sizes = [8, 17], strides = [1, 1]} : vector<8x256xf32> to vector<8x17xf32>
    %67 = vector.extract_strided_slice %64 {offsets = [0, 0], sizes = [8, 239], strides = [1, 1]} : vector<8x256xf32> to vector<8x239xf32>
    %68 = tpu.concatenate %66, %67 in 1 : vector<8x17xf32>, vector<8x239xf32> -> vector<8x256xf32>
    %69 = arith.select %21, %68, %2 : vector<8x256xi1>, vector<8x256xf32>
    %70 = vector.extract_strided_slice %2 {offsets = [0, 0], sizes = [8, 16], strides = [1, 1]} : vector<8x256xf32> to vector<8x16xf32>
    %71 = vector.extract_strided_slice %64 {offsets = [0, 0], sizes = [8, 240], strides = [1, 1]} : vector<8x256xf32> to vector<8x240xf32>
    %72 = tpu.concatenate %70, %71 in 1 : vector<8x16xf32>, vector<8x240xf32> -> vector<8x256xf32>
    %73 = vector.extract_strided_slice %2 {offsets = [0, 0], sizes = [8, 15], strides = [1, 1]} : vector<8x256xf32> to vector<8x15xf32>
    %74 = vector.extract_strided_slice %64 {offsets = [0, 0], sizes = [8, 241], strides = [1, 1]} : vector<8x256xf32> to vector<8x241xf32>
    %75 = tpu.concatenate %73, %74 in 1 : vector<8x15xf32>, vector<8x241xf32> -> vector<8x256xf32>
    %76 = arith.select %23, %75, %2 : vector<8x256xi1>, vector<8x256xf32>
    %77 = vector.extract_strided_slice %2 {offsets = [0, 0], sizes = [8, 1], strides = [1, 1]} : vector<8x256xf32> to vector<8x1xf32>
    %78 = vector.extract_strided_slice %64 {offsets = [0, 0], sizes = [8, 255], strides = [1, 1]} : vector<8x256xf32> to vector<8x255xf32>
    %79 = tpu.concatenate %77, %78 in 1 : vector<8x1xf32>, vector<8x255xf32> -> vector<8x256xf32>
    %80 = arith.select %21, %79, %2 : vector<8x256xi1>, vector<8x256xf32>
    %81 = vector.extract_strided_slice %64 {offsets = [0, 1], sizes = [8, 255], strides = [1, 1]} : vector<8x256xf32> to vector<8x255xf32>
    %82 = vector.extract_strided_slice %2 {offsets = [0, 0], sizes = [8, 1], strides = [1, 1]} : vector<8x256xf32> to vector<8x1xf32>
    %83 = tpu.concatenate %81, %82 in 1 : vector<8x255xf32>, vector<8x1xf32> -> vector<8x256xf32>
    %84 = arith.select %23, %83, %2 : vector<8x256xi1>, vector<8x256xf32>
    %85 = vector.extract_strided_slice %64 {offsets = [0, 15], sizes = [8, 241], strides = [1, 1]} : vector<8x256xf32> to vector<8x241xf32>
    %86 = vector.extract_strided_slice %2 {offsets = [0, 0], sizes = [8, 15], strides = [1, 1]} : vector<8x256xf32> to vector<8x15xf32>
    %87 = tpu.concatenate %85, %86 in 1 : vector<8x241xf32>, vector<8x15xf32> -> vector<8x256xf32>
    %88 = arith.select %21, %87, %2 : vector<8x256xi1>, vector<8x256xf32>
    %89 = vector.extract_strided_slice %64 {offsets = [0, 16], sizes = [8, 240], strides = [1, 1]} : vector<8x256xf32> to vector<8x240xf32>
    %90 = vector.extract_strided_slice %2 {offsets = [0, 0], sizes = [8, 16], strides = [1, 1]} : vector<8x256xf32> to vector<8x16xf32>
    %91 = tpu.concatenate %89, %90 in 1 : vector<8x240xf32>, vector<8x16xf32> -> vector<8x256xf32>
    %92 = vector.extract_strided_slice %64 {offsets = [0, 17], sizes = [8, 239], strides = [1, 1]} : vector<8x256xf32> to vector<8x239xf32>
    %93 = vector.extract_strided_slice %2 {offsets = [0, 0], sizes = [8, 17], strides = [1, 1]} : vector<8x256xf32> to vector<8x17xf32>
    %94 = tpu.concatenate %92, %93 in 1 : vector<8x239xf32>, vector<8x17xf32> -> vector<8x256xf32>
    %95 = arith.select %23, %94, %2 : vector<8x256xi1>, vector<8x256xf32>
    %96 = tpu.concatenate %69, %72, %76, %80, %64, %84, %88, %91, %95 in 0 : vector<8x256xf32>, vector<8x256xf32>, vector<8x256xf32>, vector<8x256xf32>, vector<8x256xf32>, vector<8x256xf32>, vector<8x256xf32>, vector<8x256xf32>, vector<8x256xf32> -> vector<72x256xf32>
    %cst_16 = arith.constant dense<0.000000e+00> : vector<4x256xf32>
    %97 = tpu.matmul %65, %96, %cst_16 {dimension_numbers = #tpu.dot_dimension_numbers<[1], [0], [0], [1], [0, 0, 1, 1], [], []>} : vector<4x72xf32>, vector<72x256xf32>, vector<4x256xf32> -> vector<4x256xf32>
    %c0_17 = arith.constant 0 : index
    %c0_18 = arith.constant 0 : index
    %98 = vector.load %arg6[%c0_17, %c0_18] : memref<4x1xf32, #tpu.memory_space<vmem>>, vector<4x1xf32>
    %99 = vector.broadcast %98 : vector<4x1xf32> to vector<4x256xf32>
    %100 = arith.mulf %97, %99 : vector<4x256xf32>
    %c0_19 = arith.constant 0 : index
    %c0_20 = arith.constant 0 : index
    %101 = vector.load %arg7[%c0_19, %c0_20] : memref<4x1xf32, #tpu.memory_space<vmem>>, vector<4x1xf32>
    %102 = vector.broadcast %101 : vector<4x1xf32> to vector<4x256xf32>
    %103 = arith.addf %100, %102 : vector<4x256xf32>
    %104 = vector.extract_strided_slice %1 {offsets = [0, 0], sizes = [4, 256], strides = [1, 1]} : vector<8x256xf32> to vector<4x256xf32>
    %105 = arith.addf %103, %104 : vector<4x256xf32>
    %cst_21 = arith.constant 0.000000e+00 : f32
    %106 = vector.broadcast %cst_21 : f32 to vector<4x256xf32>
    %107 = arith.maximumf %105, %106 : vector<4x256xf32>
    %c0_22 = arith.constant 0 : index
    %c0_23 = arith.constant 0 : index
    %c0_24 = arith.constant 0 : index
    %108 = vector.load %arg8[%c0_22, %c0_23, %c0_24] : memref<1x4x256xf32, #tpu.memory_space<vmem>>, vector<1x4x256xf32>
    %109 = vector.shape_cast %108 : vector<1x4x256xf32> to vector<4x256xf32>
    %110 = vector.shape_cast %107 : vector<4x256xf32> to vector<1x4x256xf32>
    tpu.vector_store %arg8[%c0_22, %c0_23, %c0_24], %110 {strides = array<i32>} : memref<1x4x256xf32, #tpu.memory_space<vmem>>, vector<1x4x256xf32>,
    return
  }
  func.func @transform_0(%arg0: i32) -> (i32, i32, i32) {
    %c0_i32 = arith.constant 0 : i32
    %c0_i32_0 = arith.constant 0 : i32
    %c0_i32_1 = arith.constant 0 : i32
    return %arg0, %c0_i32, %c0_i32_0 : i32, i32, i32
  }
  func.func @transform_1(%arg0: i32) -> (i32, i32) {
    %c0_i32 = arith.constant 0 : i32
    %c0_i32_0 = arith.constant 0 : i32
    %c0_i32_1 = arith.constant 0 : i32
    return %c0_i32, %c0_i32_0 : i32, i32
  }
  func.func @transform_2(%arg0: i32) -> (i32, i32) {
    %c0_i32 = arith.constant 0 : i32
    %c0_i32_0 = arith.constant 0 : i32
    %c0_i32_1 = arith.constant 0 : i32
    return %c0_i32, %c0_i32_0 : i32, i32
  }
  func.func @transform_3(%arg0: i32) -> (i32, i32) {
    %c0_i32 = arith.constant 0 : i32
    %c0_i32_0 = arith.constant 0 : i32
    %c0_i32_1 = arith.constant 0 : i32
    return %c0_i32, %c0_i32_0 : i32, i32
  }
  func.func @transform_4(%arg0: i32) -> (i32, i32) {
    %c0_i32 = arith.constant 0 : i32
    %c0_i32_0 = arith.constant 0 : i32
    %c0_i32_1 = arith.constant 0 : i32
    return %c0_i32, %c0_i32_0 : i32, i32
  }
  func.func @transform_5(%arg0: i32) -> (i32, i32) {
    %c0_i32 = arith.constant 0 : i32
    %c0_i32_0 = arith.constant 0 : i32
    %c0_i32_1 = arith.constant 0 : i32
    return %c0_i32, %c0_i32_0 : i32, i32
  }
  func.func @transform_6(%arg0: i32) -> (i32, i32) {
    %c0_i32 = arith.constant 0 : i32
    %c0_i32_0 = arith.constant 0 : i32
    %c0_i32_1 = arith.constant 0 : i32
    return %c0_i32, %c0_i32_0 : i32, i32
  }
  func.func @transform_7(%arg0: i32) -> (i32, i32, i32) {
    %c0_i32 = arith.constant 0 : i32
    %c0_i32_0 = arith.constant 0 : i32
    %c0_i32_1 = arith.constant 0 : i32
    return %arg0, %c0_i32, %c0_i32_0 : i32, i32, i32
  }
}

</mosaic_0001>

<llo_original>
// kernel: tpu_custom_call.1
$region0: #{tpu_custom_call.1}
  #allocation0 [shape = 'u32[]', space=smem, size = 0x4, offset = 0x4, fixed_abs, tag = 'smem constant byte address 0x4 - core index']
  #allocation1 [shape = 'u32[144,128]{1,0:T(1,128)}', space=vmem, size = 0x12000, scoped, tag = 'internal scratch']
  %s0 = inlined_call_operand.hbm [shape: f32[2,8,256], index: 0, kind: input, shape index: {}]
  %s1 = inlined_call_operand.vmem [shape: f32[8,72], index: 1, kind: input, shape index: {}]
  %s2 = inlined_call_operand.vmem [shape: f32[8,1], index: 2, kind: input, shape index: {}]
  %s3 = inlined_call_operand.vmem [shape: f32[8,1], index: 3, kind: input, shape index: {}]
  %s4 = inlined_call_operand.vmem [shape: f32[4,72], index: 4, kind: input, shape index: {}]
  %s5 = inlined_call_operand.vmem [shape: f32[4,1], index: 5, kind: input, shape index: {}]
  %s6 = inlined_call_operand.vmem [shape: f32[4,1], index: 6, kind: input, shape index: {}]
  %s7 = inlined_call_operand.hbm [shape: f32[2,4,256], index: 7, kind: output, shape index: {}]
  %s8 = sld [smem:[#allocation0]]
  $region65: #{tpu_custom_call.1} parent=0
    _
  %s10 = ssub.s32 1, %s8
  %s11 = scalar_select 0, %s10, %s8
  $region1: #{tpu_custom_call.1} parent=0
    #allocation2 [shape = 'u8[16384]{0}', space=vmem, size = 0x4000, scoped, tag = 'input window, operand 0']
    #allocation3 [shape = 's32[2]{0}', space=sflag, size = 0x8, scoped, tag = 'scoped memory for tpu_custom_call.1']
    #allocation4 [shape = 's32[2]{0}', space=sflag, size = 0x8, scoped, tag = 'scoped memory for tpu_custom_call.1']
    #allocation5 [shape = 'u8[8192]{0}', space=vmem, size = 0x2000, scoped, tag = 'output window, operand 0']
    %12 = vsyncpa [#allocation3], 0
    %s13 = scalar_lea.sflag [#allocation3], 1
    %14 = vsyncpa %s13, 0
    %15 = vsyncpa [#allocation4], 0
    %s16 = scalar_lea.sflag [#allocation4], 1
    %17 = vsyncpa %s16, 0
    loop: start=0, step=1, limit=4
    $region2: #{tpu_custom_call.1} parent=1 // loop_pre_header
      _
    $region3: #{tpu_custom_call.1} parent=1 // loop_header
      %s19 = sphi 0, %s23
      %p20 = scmp.ge.s32.totalorder %s19, 4
      %s29 = sphi 0, %s31
      %s32 = sphi 0, %s29
      %s33 = sphi 0, %s32
      %s49 = sphi 0, %s33
      %s53 = sphi 0, %s53
      %s55 = sphi 0, %s53
      %s56 = sphi 0, %s55
      %s70 = sphi 0, %s56
      %s74 = sphi 0, %s74
      %s76 = sphi 0, %s74
      %s77 = sphi 0, %s76
      %s91 = sphi 0, %s77
      %s95 = sphi 0, %s95
      %s97 = sphi 0, %s95
      %s98 = sphi 0, %s97
      %s112 = sphi 0, %s98
      %s116 = sphi 0, %s116
      %s118 = sphi 0, %s116
      %s119 = sphi 0, %s118
      %s133 = sphi 0, %s119
      %s137 = sphi 0, %s137
      %s139 = sphi 0, %s137
      %s140 = sphi 0, %s139
      %s154 = sphi 0, %s140
      %s158 = sphi 0, %s158
      %s160 = sphi 0, %s158
      %s161 = sphi 0, %s160
      %s175 = sphi 0, %s161
      %s181 = sphi 0, %s183
      %s184 = sphi 0, %s181
      %s185 = sphi 0, %s184
      %s201 = sphi 0, %s185
    $region4: #{tpu_custom_call.1} parent=1 // loop_header_branch
      %22 = sbr.rel (%p20) target = $region8
    $region5: #{tpu_custom_call.1} parent=1 // loop_body
      %s24 = ssub.s32 %s19, 1
      %s25 = ssub.s32 %s19, 2
      %s26 = sadd.s32 %s19, 1
      %s27 = ssub.s32 %s19, %s26
      %p28 = scmp.eq.s32.totalorder %s27, 0
      %s30 = sadd.s32 %s29, 1
      %s31 = scalar_select %p28, %s29, %s30
      %p34 = pneg %p28
      %p35 = scmp.eq.s32.totalorder %s19, 1
      %p36 = por %p34, %p35
      %p37 = scmp.ne.s32.totalorder %s29, %s32
      %p38 = scmp.eq.s32.totalorder %s19, 0
      %p39 = por %p37, %p38
      %p40 = scmp.ne.s32.totalorder %s29, %s32
      %p41 = scmp.eq.s32.totalorder %s24, 1
      %p42 = por %p40, %p41
      %p43 = scmp.ne.s32.totalorder %s32, %s33
      %p44 = scmp.eq.s32.totalorder %s24, 0
      %p45 = por %p43, %p44
      %p46 = scmp.ne.s32.totalorder %s32, %s33
      %p47 = scmp.eq.s32.totalorder %s25, 1
      %p48 = por %p46, %p47
      %p50 = scmp.ne.s32.totalorder %s33, %s49
      %p51 = scmp.eq.s32.totalorder %s25, 0
      %p52 = por %p50, %p51
      %s54 = sadd.s32 %s53, 1
      %p57 = scmp.eq.s32.totalorder %s19, 1
      %p58 = scmp.ne.s32.totalorder %s53, %s55
      %p59 = scmp.eq.s32.totalorder %s19, 0
      %p60 = por %p58, %p59
      %p61 = scmp.ne.s32.totalorder %s53, %s55
      %p62 = scmp.eq.s32.totalorder %s24, 1
      %p63 = por %p61, %p62
      %p64 = scmp.ne.s32.totalorder %s55, %s56
      %p65 = scmp.eq.s32.totalorder %s24, 0
      %p66 = por %p64, %p65
      %p67 = scmp.ne.s32.totalorder %s55, %s56
      %p68 = scmp.eq.s32.totalorder %s25, 1
      %p69 = por %p67, %p68
      %p71 = scmp.ne.s32.totalorder %s56, %s70
      %p72 = scmp.eq.s32.totalorder %s25, 0
      %p73 = por %p71, %p72
      %s75 = sadd.s32 %s74, 1
      %p78 = scmp.eq.s32.totalorder %s19, 1
      %p79 = scmp.ne.s32.totalorder %s74, %s76
      %p80 = scmp.eq.s32.totalorder %s19, 0
      %p81 = por %p79, %p80
      %p82 = scmp.ne.s32.totalorder %s74, %s76
      %p83 = scmp.eq.s32.totalorder %s24, 1
      %p84 = por %p82, %p83
      %p85 = scmp.ne.s32.totalorder %s76, %s77
      %p86 = scmp.eq.s32.totalorder %s24, 0
      %p87 = por %p85, %p86
      %p88 = scmp.ne.s32.totalorder %s76, %s77
      %p89 = scmp.eq.s32.totalorder %s25, 1
      %p90 = por %p88, %p89
      %p92 = scmp.ne.s32.totalorder %s77, %s91
      %p93 = scmp.eq.s32.totalorder %s25, 0
      %p94 = por %p92, %p93
      %s96 = sadd.s32 %s95, 1
      %p99 = scmp.eq.s32.totalorder %s19, 1
      %p100 = scmp.ne.s32.totalorder %s95, %s97
      %p101 = scmp.eq.s32.totalorder %s19, 0
      %p102 = por %p100, %p101
      %p103 = scmp.ne.s32.totalorder %s95, %s97
      %p104 = scmp.eq.s32.totalorder %s24, 1
      %p105 = por %p103, %p104
      %p106 = scmp.ne.s32.totalorder %s97, %s98
      %p107 = scmp.eq.s32.totalorder %s24, 0
      %p108 = por %p106, %p107
      %p109 = scmp.ne.s32.totalorder %s97, %s98
      %p110 = scmp.eq.s32.totalorder %s25, 1
      %p111 = por %p109, %p110
      %p113 = scmp.ne.s32.totalorder %s98, %s112
      %p114 = scmp.eq.s32.totalorder %s25, 0
      %p115 = por %p113, %p114
      %s117 = sadd.s32 %s116, 1
      %p120 = scmp.eq.s32.totalorder %s19, 1
      %p121 = scmp.ne.s32.totalorder %s116, %s118
      %p122 = scmp.eq.s32.totalorder %s19, 0
      %p123 = por %p121, %p122
      %p124 = scmp.ne.s32.totalorder %s116, %s118
      %p125 = scmp.eq.s32.totalorder %s24, 1
      %p126 = por %p124, %p125
      %p127 = scmp.ne.s32.totalorder %s118, %s119
      %p128 = scmp.eq.s32.totalorder %s24, 0
      %p129 = por %p127, %p128
      %p130 = scmp.ne.s32.totalorder %s118, %s119
      %p131 = scmp.eq.s32.totalorder %s25, 1
      %p132 = por %p130, %p131
      %p134 = scmp.ne.s32.totalorder %s119, %s133
      %p135 = scmp.eq.s32.totalorder %s25, 0
      %p136 = por %p134, %p135
      %s138 = sadd.s32 %s137, 1
      %p141 = scmp.eq.s32.totalorder %s19, 1
      %p142 = scmp.ne.s32.totalorder %s137, %s139
      %p143 = scmp.eq.s32.totalorder %s19, 0
      %p144 = por %p142, %p143
      %p145 = scmp.ne.s32.totalorder %s137, %s139
      %p146 = scmp.eq.s32.totalorder %s24, 1
      %p147 = por %p145, %p146
      %p148 = scmp.ne.s32.totalorder %s139, %s140
      %p149 = scmp.eq.s32.totalorder %s24, 0
      %p150 = por %p148, %p149
      %p151 = scmp.ne.s32.totalorder %s139, %s140
      %p152 = scmp.eq.s32.totalorder %s25, 1
      %p153 = por %p151, %p152
      %p155 = scmp.ne.s32.totalorder %s140, %s154
      %p156 = scmp.eq.s32.totalorder %s25, 0
      %p157 = por %p155, %p156
      %s159 = sadd.s32 %s158, 1
      %p162 = scmp.eq.s32.totalorder %s19, 1
      %p163 = scmp.ne.s32.totalorder %s158, %s160
      %p164 = scmp.eq.s32.totalorder %s19, 0
      %p165 = por %p163, %p164
      %p166 = scmp.ne.s32.totalorder %s158, %s160
      %p167 = scmp.eq.s32.totalorder %s24, 1
      %p168 = por %p166, %p167
      %p169 = scmp.ne.s32.totalorder %s160, %s161
      %p170 = scmp.eq.s32.totalorder %s24, 0
      %p171 = por %p169, %p170
      %p172 = scmp.ne.s32.totalorder %s160, %s161
      %p173 = scmp.eq.s32.totalorder %s25, 1
      %p174 = por %p172, %p173
      %p176 = scmp.ne.s32.totalorder %s161, %s175
      %p177 = scmp.eq.s32.totalorder %s25, 0
      %p178 = por %p176, %p177
      %s179 = ssub.s32 %s19, %s26
      %p180 = scmp.eq.s32.totalorder %s179, 0
      %s182 = sadd.s32 %s181, 1
      %s183 = scalar_select %p180, %s181, %s182
      %p186 = pneg %p180
      %p187 = scmp.eq.s32.totalorder %s19, 1
      %p188 = por %p186, %p187
      %p189 = scmp.ne.s32.totalorder %s181, %s184
      %p190 = scmp.eq.s32.totalorder %s19, 0
      %p191 = por %p189, %p190
      %p192 = scmp.ne.s32.totalorder %s181, %s184
      %p193 = scmp.eq.s32.totalorder %s24, 1
      %p194 = por %p192, %p193
      %p195 = scmp.ne.s32.totalorder %s184, %s185
      %p196 = scmp.eq.s32.totalorder %s24, 0
      %p197 = por %p195, %p196
      %p198 = scmp.ne.s32.totalorder %s184, %s185
      %p199 = scmp.eq.s32.totalorder %s25, 1
      %p200 = por %p198, %p199
      %p202 = scmp.ne.s32.totalorder %s185, %s201
      %p203 = scmp.eq.s32.totalorder %s25, 0
      %p204 = por %p202, %p203
      %p205 = scmp.le.s32.totalorder 1, %s19
      %p206 = scmp.lt.s32.totalorder %s19, 3
      %p207 = pnand %p205, %p206
      %p208 = pneg %p207
      // Predicated region
      $region9: #{tpu_custom_call.1} parent=5 // pred_check
        _
      $region10: #{tpu_custom_call.1} parent=5 // pred_check_branch
        %210 = sbr.rel (%p207) target = $region12
      $region11: #{tpu_custom_call.1} parent=5 // pred_region
        %s211 = ssub.s32 %s19, 1
        // Predicated region
        $region13: #{tpu_custom_call.1} parent=11 // pred_check
          %p212 = pneg %p66
        $region14: #{tpu_custom_call.1} parent=11 // pred_check_branch
          %214 = sbr.rel (%p212) target = $region16
        $region15: #{tpu_custom_call.1} parent=11 // pred_region
          _
        $region16: #{tpu_custom_call.1} parent=11 // pred_fallthru
          _
        // Predicated region
        $region17: #{tpu_custom_call.1} parent=11 // pred_check
          %p215 = pneg %p87
        $region18: #{tpu_custom_call.1} parent=11 // pred_check_branch
          %217 = sbr.rel (%p215) target = $region20
        $region19: #{tpu_custom_call.1} parent=11 // pred_region
          _
        $region20: #{tpu_custom_call.1} parent=11 // pred_fallthru
          _
        // Predicated region
        $region21: #{tpu_custom_call.1} parent=11 // pred_check
          %p218 = pneg %p108
        $region22: #{tpu_custom_call.1} parent=11 // pred_check_branch
          %220 = sbr.rel (%p218) target = $region24
        $region23: #{tpu_custom_call.1} parent=11 // pred_region
          _
        $region24: #{tpu_custom_call.1} parent=11 // pred_fallthru
          _
        // Predicated region
        $region25: #{tpu_custom_call.1} parent=11 // pred_check
          %p221 = pneg %p129
        $region26: #{tpu_custom_call.1} parent=11 // pred_check_branch
          %223 = sbr.rel (%p221) target = $region28
        $region27: #{tpu_custom_call.1} parent=11 // pred_region
          _
        $region28: #{tpu_custom_call.1} parent=11 // pred_fallthru
          _
        // Predicated region
        $region29: #{tpu_custom_call.1} parent=11 // pred_check
          %p224 = pneg %p150
        $region30: #{tpu_custom_call.1} parent=11 // pred_check_branch
          %226 = sbr.rel (%p224) target = $region32
        $region31: #{tpu_custom_call.1} parent=11 // pred_region
          _
        $region32: #{tpu_custom_call.1} parent=11 // pred_fallthru
          _
        // Predicated region
        $region33: #{tpu_custom_call.1} parent=11 // pred_check
          %p227 = pneg %p171
        $region34: #{tpu_custom_call.1} parent=11 // pred_check_branch
          %229 = sbr.rel (%p227) target = $region36
        $region35: #{tpu_custom_call.1} parent=11 // pred_region
          _
        $region36: #{tpu_custom_call.1} parent=11 // pred_fallthru
          _
      $region12: #{tpu_custom_call.1} parent=5 // pred_fallthru
        _
      %p230 = scmp.lt.s32.totalorder %s19, 2
      // Predicated region
      $region37: #{tpu_custom_call.1} parent=5 // pred_check
        %p231 = pneg %p230
      $region38: #{tpu_custom_call.1} parent=5 // pred_check_branch
        %233 = sbr.rel (%p231) target = $region40
      $region39: #{tpu_custom_call.1} parent=5 // pred_region
        // Predicated region
        $region41: #{tpu_custom_call.1} parent=39 // pred_check
          %p234 = pneg %p39
        $region42: #{tpu_custom_call.1} parent=39 // pred_check_branch
          %236 = sbr.rel (%p234) target = $region44
        $region43: #{tpu_custom_call.1} parent=39 // pred_region
          %s237 = sand.u32 %s29, 1
          %s238 = scalar_lea.sflag [#allocation3], %s237
          %s239 = sand.u32 %s29, 1
          %s240 = smul.addr %s239, 16
          %s241 = scalar_lea.vmem [#allocation2], %s240
          %s243 = ssub.s32 256, 256
          %244 = vsyncadd %s238, %s243
          %s245 = smul.addr %s19, 2
          %s246 = smul.addr %s245, 128
          %s247 = scalar_lea.hbm %s0, %s246
          %s249 = sshll.u32 %s241, 4
          %s250 = int_to_ptr.vmem [resolvable:$true] %s249
          %252 = dma.hbm_to_vmem [thread:$0]  %s247, 256, %s250, %s238
        $region44: #{tpu_custom_call.1} parent=39 // pred_fallthru
          _
      $region40: #{tpu_custom_call.1} parent=5 // pred_fallthru
        _
      %p253 = scmp.le.s32.totalorder 1, %s19
      %p254 = scmp.lt.s32.totalorder %s19, 3
      %p255 = pnand %p253, %p254
      %p256 = pneg %p255
      // Predicated region
      $region45: #{tpu_custom_call.1} parent=5 // pred_check
        _
      $region46: #{tpu_custom_call.1} parent=5 // pred_check_branch
        %258 = sbr.rel (%p255) target = $region48
      $region47: #{tpu_custom_call.1} parent=5 // pred_region
        %s259 = ssub.s32 %s19, 1
        %s260 = sand.u32 %s32, 1
        %s261 = scalar_lea.sflag [#allocation3], %s260
        %s262 = sand.u32 %s32, 1
        %s263 = smul.addr %s262, 16
        %s264 = scalar_lea.vmem [#allocation2], %s263
        // Predicated region
        $region49: #{tpu_custom_call.1} parent=47 // pred_check
          %p265 = pneg %p45
        $region50: #{tpu_custom_call.1} parent=47 // pred_check_branch
          %267 = sbr.rel (%p265) target = $region52
        $region51: #{tpu_custom_call.1} parent=47 // pred_region
          %268 = dma.done %s261, 256
        $region52: #{tpu_custom_call.1} parent=47 // pred_fallthru
          _
        %s269 = sand.u32 %s32, 1
        %s270 = scalar_lea.sflag [#allocation3], %s269
        %s271 = sand.u32 %s32, 1
        %s272 = smul.addr %s271, 16
        %s273 = scalar_lea.vmem [#allocation2], %s272
        %p274 = pneg %p45
        %p275 = pneg %p42
        %p276 = pneg %p66
        %p277 = pneg %p63
        %p278 = pneg %p87
        %p279 = pneg %p84
        %p280 = pneg %p108
        %p281 = pneg %p105
        %p282 = pneg %p129
        %p283 = pneg %p126
        %p284 = pneg %p150
        %p285 = pneg %p147
        %p286 = pneg %p171
        %p287 = pneg %p168
        %p288 = pneg %p197
        %p289 = pneg %p194
        %s290 = sand.u32 %s184, 1
        %s291 = scalar_lea.sflag [#allocation4], %s290
        %s292 = sand.u32 %s184, 1
        %s293 = smul.addr %s292, 8
        %s294 = scalar_lea.vmem [#allocation5], %s293
        %v295 = vld [vmem:[%s264] sm:$0xff]
        %v296 = vld [vmem:[%s264 + $0x8] sm:$0xff]
        %v297 = vlaneseq
        %v298 = vand.u32 %v297, 127
        %v299 = vadd.s32 %v298, 128
        %vm300 = vcmp.lt.s32.totalorder %v298, 0
        %v301 = vsub.s32 0, %v298
        %v302 = vsel %vm300, %v301, %v298
        %v303 = vshrl.u32 %v302, 4
        %v304 = vand.u32 %v302, 15
        %v305 = vsub.s32 0, %v304
        %v306 = vsel %vm300, %v305, %v304
        %vm307 = vcmp.lt.s32.totalorder %v299, 0
        %v308 = vsub.s32 0, %v299
        %v309 = vsel %vm307, %v308, %v299
        %v310 = vshrl.u32 %v309, 4
        %v311 = vand.u32 %v309, 15
        %v312 = vsub.s32 0, %v311
        %v313 = vsel %vm307, %v312, %v311
        %vm314 = vcmp.ne.s32.totalorder %v306, 0
        %vm315 = vcmp.ne.s32.totalorder %v313, 0
        %vm316 = vcmp.lt.s32.totalorder %v306, 0
        %vm317 = vcmp.lt.s32.totalorder %v313, 0
        %vm318 = vmand %vm316, %vm314
        %vm319 = vmand %vm317, %vm315
        %v320 = vadd.s32 %v306, 16
        %v321 = vadd.s32 %v313, 16
        %v322 = vsel %vm318, %v320, %v306
        %v323 = vsel %vm319, %v321, %v313
        %vm324 = vcmp.ge.s32.totalorder %v322, 1
        %vm325 = vcmp.ge.s32.totalorder %v323, 1
        %vm326 = vcmp.lt.s32.totalorder %v322, 15
        %vm327 = vcmp.lt.s32.totalorder %v323, 15
        %v328 = vld [vmem:[%s1] sm:$0xff]
        %331 = vrot.lane.b32.xlu0 %v295, 17
        %v332 = vpop.permute.xlu0 %331
        %333 = vrot.lane.b32.xlu0 %v296, 17
        %v334 = vpop.permute.xlu0 %333
        %vm335 = vcmask 138240
        %v336 = vsel %vm335, %v332, %v334
        %v339 = vsel %vm335, 0.0, %v332
        %v340 = vsel %vm324, %v339, 0.0
        %v341 = vsel %vm325, %v336, 0.0
        %342 = vrot.lane.b32.xlu0 %v295, 16
        %v343 = vpop.permute.xlu0 %342
        %344 = vrot.lane.b32.xlu0 %v296, 16
        %v345 = vpop.permute.xlu0 %344
        %vm346 = vcmask 130048
        %v347 = vsel %vm346, %v343, %v345
        %v350 = vsel %vm346, 0.0, %v343
        %351 = vrot.lane.b32.xlu0 %v295, 15
        %v352 = vpop.permute.xlu0 %351
        %353 = vrot.lane.b32.xlu0 %v296, 15
        %v354 = vpop.permute.xlu0 %353
        %vm355 = vcmask 121856
        %v356 = vsel %vm355, %v352, %v354
        %v359 = vsel %vm355, 0.0, %v352
        %v360 = vsel %vm326, %v359, 0.0
        %v361 = vsel %vm327, %v356, 0.0
        %362 = vrot.lane.b32.xlu0 %v295, 1
        %v363 = vpop.permute.xlu0 %362
        %364 = vrot.lane.b32.xlu0 %v296, 1
        %v365 = vpop.permute.xlu0 %364
        %vm366 = vcmask 7168
        %v367 = vsel %vm366, %v363, %v365
        %v370 = vsel %vm366, 0.0, %v363
        %v371 = vsel %vm324, %v370, 0.0
        %v372 = vsel %vm325, %v367, 0.0
        %373 = vrot.lane.b32.xlu0 %v295, 127
        %v374 = vpop.permute.xlu0 %373
        %375 = vrot.lane.b32.xlu0 %v296, 127
        %v376 = vpop.permute.xlu0 %375
        %vm377 = vcmask 1039360
        %v378 = vsel %vm377, %v374, %v376
        %v381 = vsel %vm377, %v376, 0.0
        %v382 = vsel %vm326, %v378, 0.0
        %v383 = vsel %vm327, %v381, 0.0
        %384 = vrot.lane.b32.xlu0 %v295, 113
        %v385 = vpop.permute.xlu0 %384
        %386 = vrot.lane.b32.xlu0 %v296, 113
        %v387 = vpop.permute.xlu0 %386
        %vm388 = vcmask 924672
        %v389 = vsel %vm388, %v385, %v387
        %v392 = vsel %vm388, %v387, 0.0
        %v393 = vsel %vm324, %v389, 0.0
        %v394 = vsel %vm325, %v392, 0.0
        %395 = vrot.lane.b32.xlu0 %v295, 112
        %v396 = vpop.permute.xlu0 %395
        %397 = vrot.lane.b32.xlu0 %v296, 112
        %v398 = vpop.permute.xlu0 %397
        %vm399 = vcmask 916480
        %v400 = vsel %vm399, %v396, %v398
        %v403 = vsel %vm399, %v398, 0.0
        %404 = vrot.lane.b32.xlu0 %v295, 111
        %v405 = vpop.permute.xlu0 %404
        %406 = vrot.lane.b32.xlu0 %v296, 111
        %v407 = vpop.permute.xlu0 %406
        %vm408 = vcmask 908288
        %v409 = vsel %vm408, %v405, %v407
        %v412 = vsel %vm408, %v407, 0.0
        %v413 = vsel %vm326, %v409, 0.0
        %v414 = vsel %vm327, %v412, 0.0
        %vm415 = vcmask 588800
        %v417 = vsel %vm415, %v328, 0
        %419 = vmatprep.subr.mxu0 %v341
        %420 = vmatpush1.msra.mxu0 %v340
        %421 = vmatprep.subr.mxu0 %v347
        %422 = vmatpush1.msra.mxu0 %v350
        %423 = vmatprep.subr.mxu0 %v361
        %424 = vmatpush1.msra.mxu0 %v360
        %425 = vmatprep.subr.mxu0 %v372
        %426 = vmatpush1.msra.mxu0 %v371
        %427 = vmatprep.subr.mxu0 %v296
        %428 = vmatpush1.msra.mxu0 %v295
        %429 = vmatprep.subr.mxu0 %v383
        %430 = vmatpush1.msra.mxu0 %v382
        %431 = vmatprep.subr.mxu0 %v394
        %432 = vmatpush1.msra.mxu0 %v393
        %433 = vmatprep.subr.mxu0 %v403
        %434 = vmatpush1.msra.mxu0 %v400
        %435 = vmatprep.subr.mxu0 %v414
        %436 = vmatpush1.msra.mxu0 %v413
        %437 = vmatprep.subr.mxu0 0.0
        %438 = vmatpush1.msra.mxu0 0.0
        %439 = vmatprep.subr.mxu0 0.0
        %440 = vmatpush1.msra.mxu0 0.0
        %441 = vmatprep.subr.mxu0 0.0
        %442 = vmatpush1.msra.mxu0 0.0
        %443 = vmatprep.subr.mxu0 0.0
        %444 = vmatpush1.msra.mxu0 0.0
        %445 = vmatprep.subr.mxu0 0.0
        %446 = vmatpush1.msra.mxu0 0.0
        %447 = vmatprep.subr.mxu0 0.0
        %448 = vmatpush1.msra.mxu0 0.0
        %449 = vmatprep.subr.mxu0 0.0
        %450 = vmatpush1.msra.mxu0 0.0
        %451 = vmatprep.subr.mxu0 0.0
        %452 = vmatpush1.msra.mxu0 0.0
        %453 = vmatprep.subr.mxu0 0.0
        %454 = vmatpush1.msra.mxu0 0.0
        %455 = vmatprep.subr.mxu0 0.0
        %456 = vmatpush1.msra.mxu0 0.0
        %457 = vmatprep.subr.mxu0 0.0
        %458 = vmatpush1.msra.mxu0 0.0
        %459 = vmatprep.subr.mxu0 0.0
        %460 = vmatpush1.msra.mxu0 0.0
        %461 = vmatprep.subr.mxu0 0.0
        %462 = vmatpush1.msra.mxu0 0.0
        %463 = vmatprep.subr.mxu0 0.0
        %464 = vmatpush1.msra.mxu0 0.0
        %465 = vmatprep.subr.mxu0 0.0
        %466 = vmatpush1.msra.mxu0 0.0
        %467 = vmatprep.subr.mxu0 0.0
        %468 = vmatpush1.msra.mxu0 0.0
        %469 = vmatprep.subr.mxu0 0.0
        %470 = vmatpush1.msra.mxu0 0.0
        %471 = vmatprep.subr.mxu0 0.0
        %472 = vmatpush1.msra.mxu0 0.0
        %473 = vmatprep.subr.mxu0 0.0
        %474 = vmatpush1.msra.mxu0 0.0
        %475 = vmatprep.subr.mxu0 0.0
        %476 = vmatpush1.msra.mxu0 0.0
        %477 = vmatprep.subr.mxu0 0.0
        %478 = vmatpush1.msra.mxu0 0.0
        %479 = vmatprep.subr.mxu0 0.0
        %480 = vmatpush1.msra.mxu0 0.0
        %481 = vmatprep.subr.mxu0 0.0
        %482 = vmatpush1.msra.mxu0 0.0
        %483 = vmatprep.mubr.f32.mxu0 0.0
        %484 = vmatmul.mubr.f32.gmra.mrb[0].mxu0 %v417
        %v485 = vpop.f32.mrb[0].mxu0
        %v486 = vadd.f32 0.0, %v485
        %v487 = vpop.f32.mrb[0].mxu0
        %v488 = vadd.f32 0.0, %v487
        %489 = vdwg.mxu0
        %v490 = vld [vmem:[%s2] sm:$0xff]
        %492 = vset.pattern.permute.xlu0 0
        %493 = vperm.xlu0 %492, %v490
        %v494 = vpop.permute.xlu0 %493
        %v496 = vmul.f32 %v486, %v494
        %v497 = vmul.f32 %v488, %v494
        %v498 = vld [vmem:[%s3] sm:$0xff]
        %500 = vset.pattern.permute.xlu0 0
        %501 = vperm.xlu0 %500, %v498
        %v502 = vpop.permute.xlu0 %501
        %v504 = vadd.f32 %v496, %v502
        %v505 = vadd.f32 %v497, %v502
        %v506 = vmax.f32 %v504, 0.0
        %v507 = vmax.f32 %v505, 0.0
        %v508 = vld [vmem:[%s4] sm:$0xf]
        %511 = vrot.lane.b32.xlu0 %v506, 17
        %v512 = vpop.permute.xlu0 %511
        %513 = vrot.lane.b32.xlu0 %v507, 17
        %v514 = vpop.permute.xlu0 %513
        %v515 = vsel %vm335, %v512, %v514
        %v518 = vsel %vm335, 0.0, %v512
        %v519 = vsel %vm324, %v518, 0.0
        %v520 = vsel %vm325, %v515, 0.0
        %521 = vrot.lane.b32.xlu0 %v506, 16
        %v522 = vpop.permute.xlu0 %521
        %523 = vrot.lane.b32.xlu0 %v507, 16
        %v524 = vpop.permute.xlu0 %523
        %v525 = vsel %vm346, %v522, %v524
        %v528 = vsel %vm346, 0.0, %v522
        %529 = vrot.lane.b32.xlu0 %v506, 15
        %v530 = vpop.permute.xlu0 %529
        %531 = vrot.lane.b32.xlu0 %v507, 15
        %v532 = vpop.permute.xlu0 %531
        %v533 = vsel %vm355, %v530, %v532
        %v536 = vsel %vm355, 0.0, %v530
        %v537 = vsel %vm326, %v536, 0.0
        %v538 = vsel %vm327, %v533, 0.0
        %539 = vrot.lane.b32.xlu0 %v506, 1
        %v540 = vpop.permute.xlu0 %539
        %541 = vrot.lane.b32.xlu0 %v507, 1
        %v542 = vpop.permute.xlu0 %541
        %v543 = vsel %vm366, %v540, %v542
        %v546 = vsel %vm366, 0.0, %v540
        %v547 = vsel %vm324, %v546, 0.0
        %v548 = vsel %vm325, %v543, 0.0
        %549 = vrot.lane.b32.xlu0 %v506, 127
        %v550 = vpop.permute.xlu0 %549
        %551 = vrot.lane.b32.xlu0 %v507, 127
        %v552 = vpop.permute.xlu0 %551
        %v553 = vsel %vm377, %v550, %v552
        %v556 = vsel %vm377, %v552, 0.0
        %v557 = vsel %vm326, %v553, 0.0
        %v558 = vsel %vm327, %v556, 0.0
        %559 = vrot.lane.b32.xlu0 %v506, 113
        %v560 = vpop.permute.xlu0 %559
        %561 = vrot.lane.b32.xlu0 %v507, 113
        %v562 = vpop.permute.xlu0 %561
        %v563 = vsel %vm388, %v560, %v562
        %v566 = vsel %vm388, %v562, 0.0
        %v567 = vsel %vm324, %v563, 0.0
        %v568 = vsel %vm325, %v566, 0.0
        %569 = vrot.lane.b32.xlu0 %v506, 112
        %v570 = vpop.permute.xlu0 %569
        %571 = vrot.lane.b32.xlu0 %v507, 112
        %v572 = vpop.permute.xlu0 %571
        %v573 = vsel %vm399, %v570, %v572
        %v576 = vsel %vm399, %v572, 0.0
        %577 = vrot.lane.b32.xlu0 %v506, 111
        %v578 = vpop.permute.xlu0 %577
        %579 = vrot.lane.b32.xlu0 %v507, 111
        %v580 = vpop.permute.xlu0 %579
        %v581 = vsel %vm408, %v578, %v580
        %v584 = vsel %vm408, %v580, 0.0
        %v585 = vsel %vm326, %v581, 0.0
        %v586 = vsel %vm327, %v584, 0.0
        %v588 = vsel %vm415, %v508, 0
        %590 = vmatprep.subr.mxu0 %v520
        %591 = vmatpush1.msra.mxu0 %v519
        %592 = vmatprep.subr.mxu0 %v525
        %593 = vmatpush1.msra.mxu0 %v528
        %594 = vmatprep.subr.mxu0 %v538
        %595 = vmatpush1.msra.mxu0 %v537
        %596 = vmatprep.subr.mxu0 %v548
        %597 = vmatpush1.msra.mxu0 %v547
        %598 = vmatprep.subr.mxu0 %v507
        %599 = vmatpush1.msra.mxu0 %v506
        %600 = vmatprep.subr.mxu0 %v558
        %601 = vmatpush1.msra.mxu0 %v557
        %602 = vmatprep.subr.mxu0 %v568
        %603 = vmatpush1.msra.mxu0 %v567
        %604 = vmatprep.subr.mxu0 %v576
        %605 = vmatpush1.msra.mxu0 %v573
        %606 = vmatprep.subr.mxu0 %v586
        %607 = vmatpush1.msra.mxu0 %v585
        %608 = vmatprep.subr.mxu0 0.0
        %609 = vmatpush1.msra.mxu0 0.0
        %610 = vmatprep.subr.mxu0 0.0
        %611 = vmatpush1.msra.mxu0 0.0
        %612 = vmatprep.subr.mxu0 0.0
        %613 = vmatpush1.msra.mxu0 0.0
        %614 = vmatprep.subr.mxu0 0.0
        %615 = vmatpush1.msra.mxu0 0.0
        %616 = vmatprep.subr.mxu0 0.0
        %617 = vmatpush1.msra.mxu0 0.0
        %618 = vmatprep.subr.mxu0 0.0
        %619 = vmatpush1.msra.mxu0 0.0
        %620 = vmatprep.subr.mxu0 0.0
        %621 = vmatpush1.msra.mxu0 0.0
        %622 = vmatprep.subr.mxu0 0.0
        %623 = vmatpush1.msra.mxu0 0.0
        %624 = vmatprep.subr.mxu0 0.0
        %625 = vmatpush1.msra.mxu0 0.0
        %626 = vmatprep.subr.mxu0 0.0
        %627 = vmatpush1.msra.mxu0 0.0
        %628 = vmatprep.subr.mxu0 0.0
        %629 = vmatpush1.msra.mxu0 0.0
        %630 = vmatprep.subr.mxu0 0.0
        %631 = vmatpush1.msra.mxu0 0.0
        %632 = vmatprep.subr.mxu0 0.0
        %633 = vmatpush1.msra.mxu0 0.0
        %634 = vmatprep.subr.mxu0 0.0
        %635 = vmatpush1.msra.mxu0 0.0
        %636 = vmatprep.subr.mxu0 0.0
        %637 = vmatpush1.msra.mxu0 0.0
        %638 = vmatprep.subr.mxu0 0.0
        %639 = vmatpush1.msra.mxu0 0.0
        %640 = vmatprep.subr.mxu0 0.0
        %641 = vmatpush1.msra.mxu0 0.0
        %642 = vmatprep.subr.mxu0 0.0
        %643 = vmatpush1.msra.mxu0 0.0
        %644 = vmatprep.subr.mxu0 0.0
        %645 = vmatpush1.msra.mxu0 0.0
        %646 = vmatprep.subr.mxu0 0.0
        %647 = vmatpush1.msra.mxu0 0.0
        %648 = vmatprep.subr.mxu0 0.0
        %649 = vmatpush1.msra.mxu0 0.0
        %650 = vmatprep.subr.mxu0 0.0
        %651 = vmatpush1.msra.mxu0 0.0
        %652 = vmatprep.subr.mxu0 0.0
        %653 = vmatpush1.msra.mxu0 0.0
        %654 = vmatprep.mubr.f32.mxu0 0.0
        %655 = vmatmul.mubr.f32.gmra.mrb[0].mxu0 %v588
        %v656 = vpop.f32.mrb[0].mxu0
        %v657 = vadd.f32 0.0, %v656
        %v658 = vpop.f32.mrb[0].mxu0
        %v659 = vadd.f32 0.0, %v658
        %660 = vdwg.mxu0
        %v661 = vld [vmem:[%s5] sm:$0xf]
        %663 = vset.pattern.permute.xlu0 0
        %664 = vperm.xlu0 %663, %v661
        %v665 = vpop.permute.xlu0 %664
        %v667 = vmul.f32 %v657, %v665
        %v668 = vmul.f32 %v659, %v665
        %v669 = vld [vmem:[%s6] sm:$0xf]
        %671 = vset.pattern.permute.xlu0 0
        %672 = vperm.xlu0 %671, %v669
        %v673 = vpop.permute.xlu0 %672
        %v675 = vadd.f32 %v667, %v673
        %v676 = vadd.f32 %v668, %v673
        %v677 = vadd.f32 %v675, %v295
        %v678 = vadd.f32 %v676, %v296
        %v679 = vmax.f32 %v677, 0.0
        %v680 = vmax.f32 %v678, 0.0
        %v683 = vcombine.low %v679, %v680
        %685 = vst [vmem:[%s294] sm:$0xff] %v683
        %s686 = sand.u32 %s184, 1
        %s687 = scalar_lea.sflag [#allocation4], %s686
        %s688 = sand.u32 %s184, 1
        %s689 = smul.addr %s688, 8
        %s690 = scalar_lea.vmem [#allocation5], %s689
        // Predicated region
        $region53: #{tpu_custom_call.1} parent=47 // pred_check
          %p691 = pneg %p194
        $region54: #{tpu_custom_call.1} parent=47 // pred_check_branch
          %693 = sbr.rel (%p691) target = $region56
        $region55: #{tpu_custom_call.1} parent=47 // pred_region
          %s695 = ssub.s32 128, 128
          %696 = vsyncadd %s687, %s695
          %s697 = smul.addr %s24, 2
          %s698 = smul.addr %s697, 64
          %s699 = scalar_lea.hbm %s7, %s698
          %s701 = sshll.u32 %s690, 4
          %s702 = int_to_ptr.vmem [resolvable:$true] %s701
          %704 = dma.vmem_to_hbm [thread:$0]  %s702, 128, %s699, %s687
        $region56: #{tpu_custom_call.1} parent=47 // pred_fallthru
          _
      $region48: #{tpu_custom_call.1} parent=5 // pred_fallthru
        _
      %p705 = scmp.le.s32.totalorder 2, %s19
      // Predicated region
      $region57: #{tpu_custom_call.1} parent=5 // pred_check
        %p706 = pneg %p705
      $region58: #{tpu_custom_call.1} parent=5 // pred_check_branch
        %708 = sbr.rel (%p706) target = $region60
      $region59: #{tpu_custom_call.1} parent=5 // pred_region
        %s709 = ssub.s32 %s19, 2
        // Predicated region
        $region61: #{tpu_custom_call.1} parent=59 // pred_check
          %p710 = pneg %p200
        $region62: #{tpu_custom_call.1} parent=59 // pred_check_branch
          %712 = sbr.rel (%p710) target = $region64
        $region63: #{tpu_custom_call.1} parent=59 // pred_region
          %s713 = sand.u32 %s185, 1
          %s714 = scalar_lea.sflag [#allocation4], %s713
          %s715 = sand.u32 %s185, 1
          %s716 = smul.addr %s715, 8
          %s717 = scalar_lea.vmem [#allocation5], %s716
          %718 = dma.done %s714, 128
        $region64: #{tpu_custom_call.1} parent=59 // pred_fallthru
          _
      $region60: #{tpu_custom_call.1} parent=5 // pred_fallthru
        _
    $region6: #{tpu_custom_call.1} parent=1 // loop_footer
      %s23 = sadd.s32 1, %s19
    $region7: #{tpu_custom_call.1} parent=1 // loop_footer_branch
      %18 = sbr.rel target = $region3
    $region8: #{tpu_custom_call.1} parent=1 // loop_exit
      _
    %719 = vsyncpa [#allocation3], 1
    %s720 = scalar_lea.sflag [#allocation3], 1
    %721 = vsyncpa %s720, 1
    %722 = vsyncpa [#allocation4], 1
    %s723 = scalar_lea.sflag [#allocation4], 1
    %724 = vsyncpa %s723, 1

</llo_original>
